<compile_context>
chip_gen: v7x
topology: tpu7x:2x2x1
jax: 0.10.0
libtpu: 0.0.40
codegen_flags: <defaults>
</compile_context>

<pallas_src>
import jax
import jax.numpy as jnp
from jax.experimental import pallas as pl
from jax.experimental.pallas import tpu as pltpu


def _round_up(x, m):
    return ((x + m - 1) // m) * m


def _mlp_kernel(x_ref, w1_ref, b1_ref, w2_ref, b2_ref, w3t_ref, b3_ref, o_ref):
    x = x_ref[...]                                              # (TILE_B, 392)
    h1 = jnp.dot(x, w1_ref[...],
                 preferred_element_type=jnp.float32) + b1_ref[...]
    h1 = jnp.maximum(h1, 0.0)                                   # ReLU
    h2 = jnp.dot(h1, w2_ref[...],
                 preferred_element_type=jnp.float32) + b2_ref[...]
    h2 = jnp.maximum(h2, 0.0)                                   # ReLU
    # lin3 has a single output column: VPU multiply + XLU reduce instead of an
    # N=1 MXU pass (keeps the vector-extended slot free; kernel is mem-bound).
    o_ref[...] = jnp.sum(h2 * w3t_ref[...], axis=-1, keepdims=True) + b3_ref[...]


def mlp_forward(x, w1, b1, w2, b2, w3, b3, *, tile_b=4096):
    """x: (B, 2, 14, 14) float32 -> (B, 1) float32."""
    B = x.shape[0]
    in_dim, hid = w1.shape
    x_flat = x.reshape(B, in_dim).astype(jnp.float32)           # torch .view equiv.

    # Tile sizing: sublane-aligned (multiple of 8), no bigger than the padded
    # batch, and split into >= 2 grid steps when the batch is big enough so
    # both v7x TensorCores get work.
    b_ceil8 = max(8, _round_up(B, 8))
    tile_b = min(_round_up(max(8, tile_b), 8), b_ceil8)
    if B >= 512:
        tile_b = min(tile_b, _round_up(pl.cdiv(B, 2), 256))
    num_tiles = pl.cdiv(B, tile_b)

    w3t = w3.reshape(1, hid)                                    # (hid,1) -> (1,hid)

    def resident(shape):
        # Weights/biases: same block every grid step -> stay VMEM-resident.
        return pl.BlockSpec(shape, lambda i: tuple(0 for _ in shape))

    out = pl.pallas_call(
        _mlp_kernel,
        out_shape=jax.ShapeDtypeStruct((B, 1), jnp.float32),
        grid=(num_tiles,),
        in_specs=[
            pl.BlockSpec((tile_b, in_dim), lambda i: (i, 0)),   # x: batch-tiled
            resident((in_dim, hid)),                            # w1
            resident((1, hid)),                                 # b1
            resident((hid, hid)),                               # w2
            resident((1, hid)),                                 # b2
            resident((1, hid)),                                 # w3 (as row)
            resident((1, 1)),                                   # b3
        ],
        # Ragged last block: rows past B are masked on writeback, so the
        # unspecified rows read past the end of x never reach the output.
        out_specs=pl.BlockSpec((tile_b, 1), lambda i: (i, 0)),
        compiler_params=pltpu.CompilerParams(
            dimension_semantics=("parallel",),                  # v7x: 2 TCs
            vmem_limit_bytes=48 << 20),                         # safe on 64 MiB v7x
    )(x_flat, w1, b1, w2, b2, w3t, b3)
    return out


def xavier_uniform(key, fan_in, fan_out):
    # Matches nn.init.xavier_uniform_ bound; stored as (fan_in, fan_out).
    bound = (6.0 / (fan_in + fan_out)) ** 0.5
    return jax.random.uniform(key, (fan_in, fan_out), jnp.float32, -bound, bound)


def _reference(x, w1, b1, w2, b2, w3, b3):
    # Same math via plain XLA (default matmul precision, matching the kernel).
    B = x.shape[0]
    xf = x.reshape(B, w1.shape[0])
    h = jnp.maximum(jnp.dot(xf, w1) + b1, 0.0)
    h = jnp.maximum(jnp.dot(h, w2) + b2, 0.0)
    return jnp.dot(h, w3) + b3


if __name__ == "__main__":
    IN_DIM = 2 * 14 * 14      # 392 (non-grayscale model)
    HIDDEN = 32               # config.hidden_dim (small for this synthetic run)

    key = jax.random.PRNGKey(0)
    kx, k1, k2, k3, kx2 = jax.random.split(key, 5)

    w1 = xavier_uniform(k1, IN_DIM, HIDDEN)
    b1 = jnp.zeros((1, HIDDEN), jnp.float32)
    w2 = xavier_uniform(k2, HIDDEN, HIDDEN)
    b2 = jnp.zeros((1, HIDDEN), jnp.float32)
    w3 = xavier_uniform(k3, HIDDEN, 1)
    b3 = jnp.zeros((1, 1), jnp.float32)

    # Small-batch check (single grid step).
    B = 8
    x = jax.random.normal(kx, (B, 2, 14, 14), jnp.float32)
    out = jax.block_until_ready(mlp_forward(x, w1, b1, w2, b2, w3, b3))
    ref = _reference(x, w1, b1, w2, b2, w3, b3)
    assert out.shape == (B, 1)
    assert jnp.allclose(out, ref, atol=1e-3, rtol=1e-3)

    # Multi-tile check (exercises batch grid + masked ragged last tile, no pad).
    B2 = 300
    x2 = jax.random.normal(kx2, (B2, 2, 14, 14), jnp.float32)
    out2 = jax.block_until_ready(
        mlp_forward(x2, w1, b1, w2, b2, w3, b3, tile_b=128))
    ref2 = _reference(x2, w1, b1, w2, b2, w3, b3)
    assert out2.shape == (B2, 1)
    assert jnp.allclose(out2, ref2, atol=1e-3, rtol=1e-3)

    print("KERNEL_OK")
</pallas_src>

<mosaic_0001>
module attributes {stable_mosaic.version = 11 : i64} {
  func.func @_mlp_kernel(%arg0: i32, %arg1: memref<8x392xf32, #tpu.memory_space<vmem>>, %arg2: memref<392x32xf32, #tpu.memory_space<vmem>>, %arg3: memref<1x32xf32, #tpu.memory_space<vmem>>, %arg4: memref<32x32xf32, #tpu.memory_space<vmem>>, %arg5: memref<1x32xf32, #tpu.memory_space<vmem>>, %arg6: memref<1x32xf32, #tpu.memory_space<vmem>>, %arg7: memref<1x1xf32, #tpu.memory_space<vmem>>, %arg8: memref<8x1xf32, #tpu.memory_space<vmem>>) attributes {dimension_semantics = [#tpu.dimension_semantics<parallel>], iteration_bounds = array<i64: 1>, scalar_prefetch = 0 : i64, scratch_operands = 0 : i64, tpu.core_type = #tpu.core_type<tc>, window_params = [{transform_indices = @transform_0, window_bounds = array<i64: 8, 392>}, {pipeline_mode = #tpu.pipeline_mode<synchronous>, transform_indices = @transform_1, window_bounds = array<i64: 392, 32>}, {pipeline_mode = #tpu.pipeline_mode<synchronous>, transform_indices = @transform_2, window_bounds = array<i64: 1, 32>}, {pipeline_mode = #tpu.pipeline_mode<synchronous>, transform_indices = @transform_3, window_bounds = array<i64: 32, 32>}, {pipeline_mode = #tpu.pipeline_mode<synchronous>, transform_indices = @transform_4, window_bounds = array<i64: 1, 32>}, {pipeline_mode = #tpu.pipeline_mode<synchronous>, transform_indices = @transform_5, window_bounds = array<i64: 1, 32>}, {pipeline_mode = #tpu.pipeline_mode<synchronous>, transform_indices = @transform_6, window_bounds = array<i64: 1, 1>}, {transform_indices = @transform_7, window_bounds = array<i64: 8, 1>}]} {
    %c0 = arith.constant 0 : index
    %c0_0 = arith.constant 0 : index
    %0 = vector.load %arg1[%c0, %c0_0] : memref<8x392xf32, #tpu.memory_space<vmem>>, vector<8x392xf32>
    %c0_1 = arith.constant 0 : index
    %c0_2 = arith.constant 0 : index
    %1 = vector.load %arg2[%c0_1, %c0_2] : memref<392x32xf32, #tpu.memory_space<vmem>>, vector<392x32xf32>
    %cst = arith.constant dense<0.000000e+00> : vector<8x32xf32>
    %2 = tpu.matmul %0, %1, %cst {dimension_numbers = #tpu.dot_dimension_numbers<[1], [0], [0], [1], [0, 0, 1, 1], [], []>} : vector<8x392xf32>, vector<392x32xf32>, vector<8x32xf32> -> vector<8x32xf32>
    %c0_3 = arith.constant 0 : index
    %c0_4 = arith.constant 0 : index
    %3 = vector.load %arg3[%c0_3, %c0_4] : memref<1x32xf32, #tpu.memory_space<vmem>>, vector<1x32xf32>
    %4 = vector.broadcast %3 : vector<1x32xf32> to vector<8x32xf32>
    %5 = arith.addf %2, %4 : vector<8x32xf32>
    %cst_5 = arith.constant 0.000000e+00 : f32
    %6 = vector.broadcast %cst_5 : f32 to vector<8x32xf32>
    %7 = arith.maximumf %5, %6 : vector<8x32xf32>
    %c0_6 = arith.constant 0 : index
    %c0_7 = arith.constant 0 : index
    %8 = vector.load %arg4[%c0_6, %c0_7] : memref<32x32xf32, #tpu.memory_space<vmem>>, vector<32x32xf32>
    %cst_8 = arith.constant dense<0.000000e+00> : vector<8x32xf32>
    %9 = tpu.matmul %7, %8, %cst_8 {dimension_numbers = #tpu.dot_dimension_numbers<[1], [0], [0], [1], [0, 0, 1, 1], [], []>} : vector<8x32xf32>, vector<32x32xf32>, vector<8x32xf32> -> vector<8x32xf32>
    %c0_9 = arith.constant 0 : index
    %c0_10 = arith.constant 0 : index
    %10 = vector.load %arg5[%c0_9, %c0_10] : memref<1x32xf32, #tpu.memory_space<vmem>>, vector<1x32xf32>
    %11 = vector.broadcast %10 : vector<1x32xf32> to vector<8x32xf32>
    %12 = arith.addf %9, %11 : vector<8x32xf32>
    %cst_11 = arith.constant 0.000000e+00 : f32
    %13 = vector.broadcast %cst_11 : f32 to vector<8x32xf32>
    %14 = arith.maximumf %12, %13 : vector<8x32xf32>
    %c0_12 = arith.constant 0 : index
    %c0_13 = arith.constant 0 : index
    %15 = vector.load %arg6[%c0_12, %c0_13] : memref<1x32xf32, #tpu.memory_space<vmem>>, vector<1x32xf32>
    %16 = vector.broadcast %15 : vector<1x32xf32> to vector<8x32xf32>
    %17 = arith.mulf %14, %16 : vector<8x32xf32>
    %cst_14 = arith.constant dense<0.000000e+00> : vector<8xf32>
    %18 = vector.multi_reduction <add>, %17, %cst_14 [1] : vector<8x32xf32> to vector<8xf32>
    %19 = vector.shape_cast %18 : vector<8xf32> to vector<8x1xf32>
    %c0_15 = arith.constant 0 : index
    %c0_16 = arith.constant 0 : index
    %20 = vector.load %arg7[%c0_15, %c0_16] : memref<1x1xf32, #tpu.memory_space<vmem>>, vector<1x1xf32>
    %21 = vector.broadcast %20 : vector<1x1xf32> to vector<8x1xf32>
    %22 = arith.addf %19, %21 : vector<8x1xf32>
    %c0_17 = arith.constant 0 : index
    %c0_18 = arith.constant 0 : index
    %23 = vector.load %arg8[%c0_17, %c0_18] : memref<8x1xf32, #tpu.memory_space<vmem>>, vector<8x1xf32>
    tpu.vector_store %arg8[%c0_17, %c0_18], %22 {strides = array<i32>} : memref<8x1xf32, #tpu.memory_space<vmem>>, vector<8x1xf32>,
    return
  }
  func.func @transform_0(%arg0: i32) -> (i32, i32) {
    %c0_i32 = arith.constant 0 : i32
    %c0_i32_0 = arith.constant 0 : i32
    return %arg0, %c0_i32 : i32, i32
  }
  func.func @transform_1(%arg0: i32) -> (i32, i32) {
    %c0_i32 = arith.constant 0 : i32
    %c0_i32_0 = arith.constant 0 : i32
    %c0_i32_1 = arith.constant 0 : i32
    return %c0_i32, %c0_i32_0 : i32, i32
  }
  func.func @transform_2(%arg0: i32) -> (i32, i32) {
    %c0_i32 = arith.constant 0 : i32
    %c0_i32_0 = arith.constant 0 : i32
    %c0_i32_1 = arith.constant 0 : i32
    return %c0_i32, %c0_i32_0 : i32, i32
  }
  func.func @transform_3(%arg0: i32) -> (i32, i32) {
    %c0_i32 = arith.constant 0 : i32
    %c0_i32_0 = arith.constant 0 : i32
    %c0_i32_1 = arith.constant 0 : i32
    return %c0_i32, %c0_i32_0 : i32, i32
  }
  func.func @transform_4(%arg0: i32) -> (i32, i32) {
    %c0_i32 = arith.constant 0 : i32
    %c0_i32_0 = arith.constant 0 : i32
    %c0_i32_1 = arith.constant 0 : i32
    return %c0_i32, %c0_i32_0 : i32, i32
  }
  func.func @transform_5(%arg0: i32) -> (i32, i32) {
    %c0_i32 = arith.constant 0 : i32
    %c0_i32_0 = arith.constant 0 : i32
    %c0_i32_1 = arith.constant 0 : i32
    return %c0_i32, %c0_i32_0 : i32, i32
  }
  func.func @transform_6(%arg0: i32) -> (i32, i32) {
    %c0_i32 = arith.constant 0 : i32
    %c0_i32_0 = arith.constant 0 : i32
    %c0_i32_1 = arith.constant 0 : i32
    return %c0_i32, %c0_i32_0 : i32, i32
  }
  func.func @transform_7(%arg0: i32) -> (i32, i32) {
    %c0_i32 = arith.constant 0 : i32
    %c0_i32_0 = arith.constant 0 : i32
    return %arg0, %c0_i32 : i32, i32
  }
}

</mosaic_0001>

<llo_original>
// kernel: tpu_custom_call.1
$region0: #{tpu_custom_call.1}
  #allocation0 [shape = 'u32[]', space=smem, size = 0x4, offset = 0x4, fixed_abs, tag = 'smem constant byte address 0x4 - core index']
  #allocation1 [shape = 'u32[144,128]{1,0:T(1,128)}', space=vmem, size = 0x12000, scoped, tag = 'internal scratch']
  #allocation2 [shape = 'f32[1,1]{1,0:T(1,128)S(1)}', space=vmem, size = 0x200, scoped, tag = 'scoped memory for tpu_custom_call.1']
  %s0 = inlined_call_operand.vmem [shape: f32[8,392], index: 0, kind: input, shape index: {}]
  %s1 = inlined_call_operand.vmem [shape: f32[392,32], index: 1, kind: input, shape index: {}]
  %s2 = inlined_call_operand.vmem [shape: f32[1,32], index: 2, kind: input, shape index: {}]
  %s3 = inlined_call_operand.vmem [shape: f32[32,32], index: 3, kind: input, shape index: {}]
  %s4 = inlined_call_operand.vmem [shape: f32[1,32], index: 4, kind: input, shape index: {}]
  %s5 = inlined_call_operand.vmem [shape: f32[1,32], index: 5, kind: input, shape index: {}]
  %s6 = inlined_call_operand.<no memory space> [shape: f32[1,1], index: 6, kind: input, shape index: {}]
  %s7 = inlined_call_operand.vmem [shape: f32[8,1], index: 7, kind: output, shape index: {}]
  %s8 = sld [smem:[#allocation0]]
  $region38: #{tpu_custom_call.1} parent=0
    _
  %s10 = ssub.s32 1, %s8
  %s11 = scalar_select 0, %s10, %s8
  %v12 = vstv %s6
  %13 = vst [vmem:[#allocation2] sm:$0x1] %v12
  // Predicated region
  $region2: #{tpu_custom_call.1} parent=0 // pred_check
    _
  $region3: #{tpu_custom_call.1} parent=0 // pred_check_branch
    %15 = sbr.rel (0) target = $region5
  $region4: #{tpu_custom_call.1} parent=0 // pred_region
    _
  $region5: #{tpu_custom_call.1} parent=0 // pred_fallthru
    _
  // Predicated region
  $region6: #{tpu_custom_call.1} parent=0 // pred_check
    _
  $region7: #{tpu_custom_call.1} parent=0 // pred_check_branch
    %17 = sbr.rel (0) target = $region9
  $region8: #{tpu_custom_call.1} parent=0 // pred_region
    _
  $region9: #{tpu_custom_call.1} parent=0 // pred_fallthru
    _
  // Predicated region
  $region10: #{tpu_custom_call.1} parent=0 // pred_check
    _
  $region11: #{tpu_custom_call.1} parent=0 // pred_check_branch
    %19 = sbr.rel (0) target = $region13
  $region12: #{tpu_custom_call.1} parent=0 // pred_region
    _
  $region13: #{tpu_custom_call.1} parent=0 // pred_fallthru
    _
  // Predicated region
  $region14: #{tpu_custom_call.1} parent=0 // pred_check
    _
  $region15: #{tpu_custom_call.1} parent=0 // pred_check_branch
    %21 = sbr.rel (0) target = $region17
  $region16: #{tpu_custom_call.1} parent=0 // pred_region
    _
  $region17: #{tpu_custom_call.1} parent=0 // pred_fallthru
    _
  // Predicated region
  $region18: #{tpu_custom_call.1} parent=0 // pred_check
    _
  $region19: #{tpu_custom_call.1} parent=0 // pred_check_branch
    %23 = sbr.rel (0) target = $region21
  $region20: #{tpu_custom_call.1} parent=0 // pred_region
    _
  $region21: #{tpu_custom_call.1} parent=0 // pred_fallthru
    _
  // Predicated region
  $region22: #{tpu_custom_call.1} parent=0 // pred_check
    _
  $region23: #{tpu_custom_call.1} parent=0 // pred_check_branch
    %25 = sbr.rel (0) target = $region25
  $region24: #{tpu_custom_call.1} parent=0 // pred_region
    _
  $region25: #{tpu_custom_call.1} parent=0 // pred_fallthru
    _
  // Predicated region
  $region26: #{tpu_custom_call.1} parent=0 // pred_check
    _
  $region27: #{tpu_custom_call.1} parent=0 // pred_check_branch
    %27 = sbr.rel (0) target = $region29
  $region28: #{tpu_custom_call.1} parent=0 // pred_region
    _
  $region29: #{tpu_custom_call.1} parent=0 // pred_fallthru
    _
  %v28 = vld [vmem:[%s0] sm:$0xff]
  %v29 = vld [vmem:[%s0 + $0x8] sm:$0xff]
  %v30 = vld [vmem:[%s0 + $0x10] sm:$0xff]
  %v31 = vld [vmem:[%s0 + $0x18] sm:$0xff]
  %v32 = vld [vmem:[%s1] sm:$0xff]
  %v33 = vld [vmem:[%s1 + $0x8] sm:$0xff]
  %v34 = vld [vmem:[%s1 + $0x10] sm:$0xff]
  %v35 = vld [vmem:[%s1 + $0x18] sm:$0xff]
  %v36 = vld [vmem:[%s1 + $0x20] sm:$0xff]
  %v37 = vld [vmem:[%s1 + $0x28] sm:$0xff]
  %v38 = vld [vmem:[%s1 + $0x30] sm:$0xff]
  %v39 = vld [vmem:[%s1 + $0x38] sm:$0xff]
  %v40 = vld [vmem:[%s1 + $0x40] sm:$0xff]
  %v41 = vld [vmem:[%s1 + $0x48] sm:$0xff]
  %v42 = vld [vmem:[%s1 + $0x50] sm:$0xff]
  %v43 = vld [vmem:[%s1 + $0x58] sm:$0xff]
  %v44 = vld [vmem:[%s1 + $0x60] sm:$0xff]
  %v45 = vld [vmem:[%s1 + $0x68] sm:$0xff]
  %v46 = vld [vmem:[%s1 + $0x70] sm:$0xff]
  %v47 = vld [vmem:[%s1 + $0x78] sm:$0xff]
  %v48 = vld [vmem:[%s1 + $0x80] sm:$0xff]
  %v49 = vld [vmem:[%s1 + $0x88] sm:$0xff]
  %v50 = vld [vmem:[%s1 + $0x90] sm:$0xff]
  %v51 = vld [vmem:[%s1 + $0x98] sm:$0xff]
  %v52 = vld [vmem:[%s1 + $0xa0] sm:$0xff]
  %v53 = vld [vmem:[%s1 + $0xa8] sm:$0xff]
  %v54 = vld [vmem:[%s1 + $0xb0] sm:$0xff]
  %v55 = vld [vmem:[%s1 + $0xb8] sm:$0xff]
  %v56 = vld [vmem:[%s1 + $0xc0] sm:$0xff]
  %v57 = vld [vmem:[%s1 + $0xc8] sm:$0xff]
  %v58 = vld [vmem:[%s1 + $0xd0] sm:$0xff]
  %v59 = vld [vmem:[%s1 + $0xd8] sm:$0xff]
  %v60 = vld [vmem:[%s1 + $0xe0] sm:$0xff]
  %v61 = vld [vmem:[%s1 + $0xe8] sm:$0xff]
  %v62 = vld [vmem:[%s1 + $0xf0] sm:$0xff]
  %v63 = vld [vmem:[%s1 + $0xf8] sm:$0xff]
  %v64 = vld [vmem:[%s1 + $0x100] sm:$0xff]
  %v65 = vld [vmem:[%s1 + $0x108] sm:$0xff]
  %v66 = vld [vmem:[%s1 + $0x110] sm:$0xff]
  %v67 = vld [vmem:[%s1 + $0x118] sm:$0xff]
  %v68 = vld [vmem:[%s1 + $0x120] sm:$0xff]
  %v69 = vld [vmem:[%s1 + $0x128] sm:$0xff]
  %v70 = vld [vmem:[%s1 + $0x130] sm:$0xff]
  %v71 = vld [vmem:[%s1 + $0x138] sm:$0xff]
  %v72 = vld [vmem:[%s1 + $0x140] sm:$0xff]
  %v73 = vld [vmem:[%s1 + $0x148] sm:$0xff]
  %v74 = vld [vmem:[%s1 + $0x150] sm:$0xff]
  %v75 = vld [vmem:[%s1 + $0x158] sm:$0xff]
  %v76 = vld [vmem:[%s1 + $0x160] sm:$0xff]
  %v77 = vld [vmem:[%s1 + $0x168] sm:$0xff]
  %v78 = vld [vmem:[%s1 + $0x170] sm:$0xff]
  %v79 = vld [vmem:[%s1 + $0x178] sm:$0xff]
  %v80 = vld [vmem:[%s1 + $0x180] sm:$0xff]
  %v81 = vld [vmem:[%s2] sm:$0x1]
  %v83 = vlaneseq
  %v84 = vshrl.u32 %v83, 7
  %v85 = vsub.s32 0, %v84
  %v86 = vrot.slane %v81, %v85
  %vm88 = vcmask 64512
  %v90 = vsel %vm88, %v31, 0
  %92 = vmatprep.subr.mxu0 0.0
  %93 = vmatpush1.msra.mxu0 %v32
  %94 = vmatprep.subr.mxu0 0.0
  %95 = vmatpush1.msra.mxu0 %v33
  %96 = vmatprep.subr.mxu0 0.0
  %97 = vmatpush1.msra.mxu0 %v34
  %98 = vmatprep.subr.mxu0 0.0
  %99 = vmatpush1.msra.mxu0 %v35
  %100 = vmatprep.subr.mxu0 0.0
  %101 = vmatpush1.msra.mxu0 %v36
  %102 = vmatprep.subr.mxu0 0.0
  %103 = vmatpush1.msra.mxu0 %v37
  %104 = vmatprep.subr.mxu0 0.0
  %105 = vmatpush1.msra.mxu0 %v38
  %106 = vmatprep.subr.mxu0 0.0
  %107 = vmatpush1.msra.mxu0 %v39
  %108 = vmatprep.subr.mxu0 0.0
  %109 = vmatpush1.msra.mxu0 %v40
  %110 = vmatprep.subr.mxu0 0.0
  %111 = vmatpush1.msra.mxu0 %v41
  %112 = vmatprep.subr.mxu0 0.0
  %113 = vmatpush1.msra.mxu0 %v42
  %114 = vmatprep.subr.mxu0 0.0
  %115 = vmatpush1.msra.mxu0 %v43
  %116 = vmatprep.subr.mxu0 0.0
  %117 = vmatpush1.msra.mxu0 %v44
  %118 = vmatprep.subr.mxu0 0.0
  %119 = vmatpush1.msra.mxu0 %v45
  %120 = vmatprep.subr.mxu0 0.0
  %121 = vmatpush1.msra.mxu0 %v46
  %122 = vmatprep.subr.mxu0 0.0
  %123 = vmatpush1.msra.mxu0 %v47
  %124 = vmatprep.subr.mxu0 0.0
  %125 = vmatpush1.msra.mxu0 %v48
  %126 = vmatprep.subr.mxu0 0.0
  %127 = vmatpush1.msra.mxu0 %v49
  %128 = vmatprep.subr.mxu0 0.0
  %129 = vmatpush1.msra.mxu0 %v50
  %130 = vmatprep.subr.mxu0 0.0
  %131 = vmatpush1.msra.mxu0 %v51
  %132 = vmatprep.subr.mxu0 0.0
  %133 = vmatpush1.msra.mxu0 %v52
  %134 = vmatprep.subr.mxu0 0.0
  %135 = vmatpush1.msra.mxu0 %v53
  %136 = vmatprep.subr.mxu0 0.0
  %137 = vmatpush1.msra.mxu0 %v54
  %138 = vmatprep.subr.mxu0 0.0
  %139 = vmatpush1.msra.mxu0 %v55
  %140 = vmatprep.subr.mxu0 0.0
  %141 = vmatpush1.msra.mxu0 %v56
  %142 = vmatprep.subr.mxu0 0.0
  %143 = vmatpush1.msra.mxu0 %v57
  %144 = vmatprep.subr.mxu0 0.0
  %145 = vmatpush1.msra.mxu0 %v58
  %146 = vmatprep.subr.mxu0 0.0
  %147 = vmatpush1.msra.mxu0 %v59
  %148 = vmatprep.subr.mxu0 0.0
  %149 = vmatpush1.msra.mxu0 %v60
  %150 = vmatprep.subr.mxu0 0.0
  %151 = vmatpush1.msra.mxu0 %v61
  %152 = vmatprep.subr.mxu0 0.0
  %153 = vmatpush1.msra.mxu0 %v62
  %154 = vmatprep.subr.mxu0 0.0
  %155 = vmatpush1.msra.mxu0 %v63
  %156 = vmatprep.mubr.f32.mxu0 %v29
  %157 = vmatmul.mubr.f32.gmra.mrb[0].mxu0 %v28
  %v158 = vpop.f32.mrb[0].mxu0
  %v159 = vadd.f32 %v86, %v158
  %v160 = vpop.f32.mrb[0].mxu0
  %161 = vdwg.mxu0
  %162 = vmatprep.subr.mxu0 0.0
  %163 = vmatpush1.msra.mxu0 %v64
  %164 = vmatprep.subr.mxu0 0.0
  %165 = vmatpush1.msra.mxu0 %v65
  %166 = vmatprep.subr.mxu0 0.0
  %167 = vmatpush1.msra.mxu0 %v66
  %168 = vmatprep.subr.mxu0 0.0
  %169 = vmatpush1.msra.mxu0 %v67
  %170 = vmatprep.subr.mxu0 0.0
  %171 = vmatpush1.msra.mxu0 %v68
  %172 = vmatprep.subr.mxu0 0.0
  %173 = vmatpush1.msra.mxu0 %v69
  %174 = vmatprep.subr.mxu0 0.0
  %175 = vmatpush1.msra.mxu0 %v70
  %176 = vmatprep.subr.mxu0 0.0
  %177 = vmatpush1.msra.mxu0 %v71
  %178 = vmatprep.subr.mxu0 0.0
  %179 = vmatpush1.msra.mxu0 %v72
  %180 = vmatprep.subr.mxu0 0.0
  %181 = vmatpush1.msra.mxu0 %v73
  %182 = vmatprep.subr.mxu0 0.0
  %183 = vmatpush1.msra.mxu0 %v74
  %184 = vmatprep.subr.mxu0 0.0
  %185 = vmatpush1.msra.mxu0 %v75
  %186 = vmatprep.subr.mxu0 0.0
  %187 = vmatpush1.msra.mxu0 %v76
  %188 = vmatprep.subr.mxu0 0.0
  %189 = vmatpush1.msra.mxu0 %v77
  %190 = vmatprep.subr.mxu0 0.0
  %191 = vmatpush1.msra.mxu0 %v78
  %192 = vmatprep.subr.mxu0 0.0
  %193 = vmatpush1.msra.mxu0 %v79
  %194 = vmatprep.subr.mxu0 0.0
  %195 = vmatpush1.msra.mxu0 %v80
  %196 = vmatprep.subr.mxu0 0.0
  %197 = vmatpush1.msra.mxu0 0.0
  %198 = vmatprep.subr.mxu0 0.0
  %199 = vmatpush1.msra.mxu0 0.0
  %200 = vmatprep.subr.mxu0 0.0
  %201 = vmatpush1.msra.mxu0 0.0
  %202 = vmatprep.subr.mxu0 0.0
  %203 = vmatpush1.msra.mxu0 0.0
  %204 = vmatprep.subr.mxu0 0.0
  %205 = vmatpush1.msra.mxu0 0.0
  %206 = vmatprep.subr.mxu0 0.0
  %207 = vmatpush1.msra.mxu0 0.0
  %208 = vmatprep.subr.mxu0 0.0
  %209 = vmatpush1.msra.mxu0 0.0
  %210 = vmatprep.subr.mxu0 0.0
  %211 = vmatpush1.msra.mxu0 0.0
  %212 = vmatprep.subr.mxu0 0.0
  %213 = vmatpush1.msra.mxu0 0.0
  %214 = vmatprep.subr.mxu0 0.0
  %215 = vmatpush1.msra.mxu0 0.0
  %216 = vmatprep.subr.mxu0 0.0
  %217 = vmatpush1.msra.mxu0 0.0
  %218 = vmatprep.subr.mxu0 0.0
  %219 = vmatpush1.msra.mxu0 0.0
  %220 = vmatprep.subr.mxu0 0.0
  %221 = vmatpush1.msra.mxu0 0.0
  %222 = vmatprep.subr.mxu0 0.0
  %223 = vmatpush1.msra.mxu0 0.0
  %224 = vmatprep.subr.mxu0 0.0
  %225 = vmatpush1.msra.mxu0 0.0
  %226 = vmatprep.mubr.f32.mxu0 %v90
  %227 = vmatmul.mubr.f32.gmra.mrb[0].mxu0 %v30
  %v228 = vpop.f32.mrb[0].mxu0
  %v229 = vadd.f32 %v159, %v228
  %v230 = vpop.f32.mrb[0].mxu0
  %231 = vdwg.mxu0
  %v232 = vmax.f32 %v229, 0.0
  %v233 = vld [vmem:[%s3] sm:$0xff]
  %v234 = vld [vmem:[%s3 + $0x8] sm:$0xff]
  %v235 = vld [vmem:[%s3 + $0x10] sm:$0xff]
  %v236 = vld [vmem:[%s3 + $0x18] sm:$0xff]
  %v237 = vld [vmem:[%s4] sm:$0x1]
  %v239 = vlaneseq
  %v240 = vshrl.u32 %v239, 7
  %v241 = vsub.s32 0, %v240
  %v242 = vrot.slane %v237, %v241
  %vm244 = vcmask 261120
  %v246 = vsel %vm244, %v232, 0
  %248 = vmatprep.subr.mxu0 0.0
  %249 = vmatpush1.msra.mxu0 %v233
  %250 = vmatprep.subr.mxu0 0.0
  %251 = vmatpush1.msra.mxu0 %v234
  %252 = vmatprep.subr.mxu0 0.0
  %253 = vmatpush1.msra.mxu0 %v235
  %254 = vmatprep.subr.mxu0 0.0
  %255 = vmatpush1.msra.mxu0 %v236
  %256 = vmatprep.subr.mxu0 0.0
  %257 = vmatpush1.msra.mxu0 0.0
  %258 = vmatprep.subr.mxu0 0.0
  %259 = vmatpush1.msra.mxu0 0.0
  %260 = vmatprep.subr.mxu0 0.0
  %261 = vmatpush1.msra.mxu0 0.0
  %262 = vmatprep.subr.mxu0 0.0
  %263 = vmatpush1.msra.mxu0 0.0
  %264 = vmatprep.subr.mxu0 0.0
  %265 = vmatpush1.msra.mxu0 0.0
  %266 = vmatprep.subr.mxu0 0.0
  %267 = vmatpush1.msra.mxu0 0.0
  %268 = vmatprep.subr.mxu0 0.0
  %269 = vmatpush1.msra.mxu0 0.0
  %270 = vmatprep.subr.mxu0 0.0
  %271 = vmatpush1.msra.mxu0 0.0
  %272 = vmatprep.subr.mxu0 0.0
  %273 = vmatpush1.msra.mxu0 0.0
  %274 = vmatprep.subr.mxu0 0.0
  %275 = vmatpush1.msra.mxu0 0.0
  %276 = vmatprep.subr.mxu0 0.0
  %277 = vmatpush1.msra.mxu0 0.0
  %278 = vmatprep.subr.mxu0 0.0
  %279 = vmatpush1.msra.mxu0 0.0
  %280 = vmatprep.subr.mxu0 0.0
  %281 = vmatpush1.msra.mxu0 0.0
  %282 = vmatprep.subr.mxu0 0.0
  %283 = vmatpush1.msra.mxu0 0.0
  %284 = vmatprep.subr.mxu0 0.0
  %285 = vmatpush1.msra.mxu0 0.0
  %286 = vmatprep.subr.mxu0 0.0
  %287 = vmatpush1.msra.mxu0 0.0
  %288 = vmatprep.subr.mxu0 0.0
  %289 = vmatpush1.msra.mxu0 0.0
  %290 = vmatprep.subr.mxu0 0.0
  %291 = vmatpush1.msra.mxu0 0.0
  %292 = vmatprep.subr.mxu0 0.0
  %293 = vmatpush1.msra.mxu0 0.0
  %294 = vmatprep.subr.mxu0 0.0
  %295 = vmatpush1.msra.mxu0 0.0
  %296 = vmatprep.subr.mxu0 0.0
  %297 = vmatpush1.msra.mxu0 0.0
  %298 = vmatprep.subr.mxu0 0.0
  %299 = vmatpush1.msra.mxu0 0.0
  %300 = vmatprep.subr.mxu0 0.0
  %301 = vmatpush1.msra.mxu0 0.0
  %302 = vmatprep.subr.mxu0 0.0
  %303 = vmatpush1.msra.mxu0 0.0
  %304 = vmatprep.subr.mxu0 0.0
  %305 = vmatpush1.msra.mxu0 0.0
  %306 = vmatprep.subr.mxu0 0.0
  %307 = vmatpush1.msra.mxu0 0.0
  %308 = vmatprep.subr.mxu0 0.0
  %309 = vmatpush1.msra.mxu0 0.0
  %310 = vmatprep.subr.mxu0 0.0
  %311 = vmatpush1.msra.mxu0 0.0
  %312 = vmatprep.mubr.f32.mxu0 0.0
  %313 = vmatmul.mubr.f32.gmra.mrb[0].mxu0 %v246
  %v314 = vpop.f32.mrb[0].mxu0
  %v315 = vadd.f32 %v242, %v314
  %v316 = vpop.f32.mrb[0].mxu0
  %317 = vdwg.mxu0
  %v318 = vmax.f32 %v315, 0.0
  %v319 = vld [vmem:[%s5] sm:$0x1]
  %v321 = vlaneseq
  %v322 = vshrl.u32 %v321, 7
  %v323 = vsub.s32 0, %v322
  %v324 = vrot.slane %v319, %v323
  %v326 = vmul.f32 %v318, %v324
  %v327 = vsel %vm244, %v326, 0.0
  %328 = vadd.xlane.f32.xlu0 %v327
  %v329 = vpop.xlane.xlu0 %328
  %v330 = vld [vmem:[#allocation2] sm:$0x1]
  %v332 = vlaneseq
  %v333 = vshrl.u32 %v332, 7
  %v334 = vsub.s32 0, %v333
  %v335 = vrot.slane %v330, %v334
  %v337 = vadd.f32 %v329, %v335
  %vm338 = vcmask 7168
  %339 = vst.msk [vmem:[%s7] sm:$0xff] %vm338, %v337
  // Predicated region
  $region30: #{tpu_custom_call.1} parent=0 // pred_check
    _
  $region31: #{tpu_custom_call.1} parent=0 // pred_check_branch
    %341 = sbr.rel (0) target = $region33
  $region32: #{tpu_custom_call.1} parent=0 // pred_region
    _
  $region33: #{tpu_custom_call.1} parent=0 // pred_fallthru
    _
  // Predicated region
  $region34: #{tpu_custom_call.1} parent=0 // pred_check
    _
  $region35: #{tpu_custom_call.1} parent=0 // pred_check_branch
    %343 = sbr.rel (0) target = $region37
  $region36: #{tpu_custom_call.1} parent=0 // pred_region
    _
  $region37: #{tpu_custom_call.1} parent=0 // pred_fallthru
    _

</llo_original>
